<compile_context>
chip_gen: v5e
topology: v5e:2x2
jax: 0.10.0
libtpu: 0.0.40
codegen_flags: <defaults>
</compile_context>

<pallas_src>
import functools

import jax
import jax.numpy as jnp
from jax.experimental import pallas as pl
from jax.experimental.pallas import tpu as pltpu


# ---------------------------------------------------------------------------
# Fused kernel: x @ W1 + b1 -> LayerNorm (one pass) -> ReLU -> @ W2 + b2
#   p_ref rows: [0]=b1, [1]=gamma, [2]=beta, [3]=b2 zero-padded to H
# ---------------------------------------------------------------------------
def _fused_kernel(x_ref, w1_ref, p_ref, w2_ref, o_ref, *, inv_h, out_dim, eps):
    p = p_ref[...]                               # (4, H) — single small load
    b1 = p[0:1, :]
    gamma = p[1:2, :]
    beta = p[2:3, :]
    b2 = p[3:4, :out_dim]                        # static slice, (1, O)

    # linear1: one K=L matmul on the MXU, f32 accumulation.
    h = jnp.dot(x_ref[...], w1_ref[...],
                preferred_element_type=jnp.float32) + b1        # (B, H)

    # LayerNorm, single reduction pass (biased variance, eps inside rsqrt).
    s = jnp.sum(h, axis=-1, keepdims=True)
    ss = jnp.sum(h * h, axis=-1, keepdims=True)
    mu = s * inv_h
    var = ss * inv_h - mu * mu
    h = (h - mu) * jax.lax.rsqrt(var + eps)
    h = h * gamma + beta

    # ReLU + linear2.
    h = jnp.maximum(h, 0.0)
    o_ref[...] = (jnp.dot(h, w2_ref[...],
                          preferred_element_type=jnp.float32) + b2
                  ).astype(o_ref.dtype)


# ---------------------------------------------------------------------------
# One-time parameter packing: [b1; gamma; beta; b2 (zero-padded to H)] -> (4, H)
# ---------------------------------------------------------------------------
def prepare_params(params):
    hidden_dim = params["w1"].shape[1]
    out_dim = params["w2"].shape[1]
    b2_pad = jnp.zeros((1, hidden_dim), dtype=jnp.float32)
    b2_pad = b2_pad.at[:, :out_dim].set(params["b2"])
    packed = jnp.concatenate(
        [params["b1"], params["gamma"], params["beta"], b2_pad], axis=0)
    return {"w1": params["w1"], "w2": params["w2"], "packed": packed}


# ---------------------------------------------------------------------------
# SimpleNet forward: one fused pallas_call per call.
# ---------------------------------------------------------------------------
def simplenet_forward(uvs, prepared):
    # Interleave exactly as the PyTorch forward: u_0, v_0, u_1, v_1, ...
    # (cat(dim=1) + flatten(start_dim=1) == flatten each then concat)
    segs = []
    for (u, v) in uvs:
        B = u.shape[0]
        segs.append(u.reshape(B, -1))
        segs.append(v.reshape(B, -1))
    x = jnp.concatenate(segs, axis=1).astype(jnp.float32)        # (B, L)

    w1 = prepared["w1"]
    w2 = prepared["w2"]
    packed = prepared["packed"]
    assert x.shape[1] == w1.shape[0], (x.shape, w1.shape)

    B = x.shape[0]
    hidden_dim = w1.shape[1]
    out_dim = w2.shape[1]

    kernel = functools.partial(
        _fused_kernel,
        inv_h=float(1.0 / hidden_dim),
        out_dim=out_dim,
        eps=1e-5,
    )

    vmem = functools.partial(pl.BlockSpec, memory_space=pltpu.MemorySpace.VMEM)
    return pl.pallas_call(
        kernel,
        out_shape=jax.ShapeDtypeStruct((B, out_dim), jnp.float32),
        in_specs=[vmem(), vmem(), vmem(), vmem()],
        out_specs=vmem(),
    )(x, w1, packed, w2)


# ---------------------------------------------------------------------------
# Pure-JAX reference for validation.
# ---------------------------------------------------------------------------
def reference_forward(uvs, params):
    flats = []
    for (u, v) in uvs:
        B = u.shape[0]
        flats.append(u.reshape(B, -1))
        flats.append(v.reshape(B, -1))
    x = jnp.concatenate(flats, axis=1)
    h = x @ params["w1"] + params["b1"]
    mu = jnp.mean(h, axis=-1, keepdims=True)
    var = jnp.mean((h - mu) ** 2, axis=-1, keepdims=True)
    h = (h - mu) / jnp.sqrt(var + 1e-5)
    h = h * params["gamma"] + params["beta"]
    h = jnp.maximum(h, 0.0)
    return h @ params["w2"] + params["b2"]


if __name__ == "__main__":
    key = jax.random.PRNGKey(0)

    # Module config (small; lin_1 in_features = sum(ns) + sum(ms)).
    ns = [4, 8]
    ms = [4, 4]
    B = 2
    hidden_dim = 32
    out_dim = 8
    in_dim = sum(ns) + sum(ms)          # 20

    # Inputs: uvs = [(u_0, v_0), (u_1, v_1)], u_i: (B, n_i), v_i: (B, m_i).
    uvs = []
    for n, m in zip(ns, ms):
        key, ku, kv = jax.random.split(key, 3)
        u = jax.random.normal(ku, (B, n), dtype=jnp.float32)
        v = jax.random.normal(kv, (B, m), dtype=jnp.float32)
        uvs.append((u, v))

    # Parameters (weights stored (in_features, out_features); LN affine defaults).
    key, k1, k2, k3, k4 = jax.random.split(key, 5)
    params = {
        "w1": jax.random.normal(k1, (in_dim, hidden_dim), dtype=jnp.float32) * 0.1,
        "b1": jax.random.normal(k2, (1, hidden_dim), dtype=jnp.float32) * 0.1,
        "gamma": jnp.ones((1, hidden_dim), dtype=jnp.float32),
        "beta": jnp.zeros((1, hidden_dim), dtype=jnp.float32),
        "w2": jax.random.normal(k3, (hidden_dim, out_dim), dtype=jnp.float32) * 0.1,
        "b2": jax.random.normal(k4, (1, out_dim), dtype=jnp.float32) * 0.1,
    }

    prepared = prepare_params(params)   # one-time packing of small params

    out = simplenet_forward(uvs, prepared)
    out = jax.block_until_ready(out)

    ref = reference_forward(uvs, params)
    assert out.shape == (B, out_dim), out.shape
    assert jnp.allclose(out, ref, atol=1e-4, rtol=1e-4), \
        float(jnp.max(jnp.abs(out - ref)))

    print("KERNEL_OK")
</pallas_src>

<mosaic_0001>
module attributes {stable_mosaic.version = 11 : i64} {
  func.func @_fused_kernel(%arg0: memref<2x20xf32, #tpu.memory_space<vmem>>, %arg1: memref<20x32xf32, #tpu.memory_space<vmem>>, %arg2: memref<4x32xf32, #tpu.memory_space<vmem>>, %arg3: memref<32x8xf32, #tpu.memory_space<vmem>>, %arg4: memref<2x8xf32, #tpu.memory_space<vmem>>) attributes {dimension_semantics = [], scalar_prefetch = 0 : i64, scratch_operands = 0 : i64, tpu.core_type = #tpu.core_type<tc>} {
    %c0 = arith.constant 0 : index
    %c0_0 = arith.constant 0 : index
    %0 = vector.load %arg2[%c0, %c0_0] : memref<4x32xf32, #tpu.memory_space<vmem>>, vector<4x32xf32>
    %1 = vector.extract_strided_slice %0 {offsets = [0, 0], sizes = [1, 32], strides = [1, 1]} : vector<4x32xf32> to vector<1x32xf32>
    %2 = vector.extract_strided_slice %0 {offsets = [1, 0], sizes = [1, 32], strides = [1, 1]} : vector<4x32xf32> to vector<1x32xf32>
    %3 = vector.extract_strided_slice %0 {offsets = [2, 0], sizes = [1, 32], strides = [1, 1]} : vector<4x32xf32> to vector<1x32xf32>
    %4 = vector.extract_strided_slice %0 {offsets = [3, 0], sizes = [1, 8], strides = [1, 1]} : vector<4x32xf32> to vector<1x8xf32>
    %c0_1 = arith.constant 0 : index
    %c0_2 = arith.constant 0 : index
    %5 = vector.load %arg0[%c0_1, %c0_2] : memref<2x20xf32, #tpu.memory_space<vmem>>, vector<2x20xf32>
    %c0_3 = arith.constant 0 : index
    %c0_4 = arith.constant 0 : index
    %6 = vector.load %arg1[%c0_3, %c0_4] : memref<20x32xf32, #tpu.memory_space<vmem>>, vector<20x32xf32>
    %cst = arith.constant dense<0.000000e+00> : vector<2x32xf32>
    %7 = tpu.matmul %5, %6, %cst {dimension_numbers = #tpu.dot_dimension_numbers<[1], [0], [0], [1], [0, 0, 1, 1], [], []>} : vector<2x20xf32>, vector<20x32xf32>, vector<2x32xf32> -> vector<2x32xf32>
    %8 = vector.broadcast %1 : vector<1x32xf32> to vector<2x32xf32>
    %9 = arith.addf %7, %8 : vector<2x32xf32>
    %cst_5 = arith.constant dense<0.000000e+00> : vector<2xf32>
    %10 = vector.multi_reduction <add>, %9, %cst_5 [1] : vector<2x32xf32> to vector<2xf32>
    %11 = vector.shape_cast %10 : vector<2xf32> to vector<2x1xf32>
    %12 = arith.mulf %9, %9 : vector<2x32xf32>
    %cst_6 = arith.constant dense<0.000000e+00> : vector<2xf32>
    %13 = vector.multi_reduction <add>, %12, %cst_6 [1] : vector<2x32xf32> to vector<2xf32>
    %14 = vector.shape_cast %13 : vector<2xf32> to vector<2x1xf32>
    %cst_7 = arith.constant 3.125000e-02 : f32
    %15 = vector.broadcast %cst_7 : f32 to vector<2x1xf32>
    %16 = arith.mulf %11, %15 : vector<2x1xf32>
    %cst_8 = arith.constant 3.125000e-02 : f32
    %17 = vector.broadcast %cst_8 : f32 to vector<2x1xf32>
    %18 = arith.mulf %14, %17 : vector<2x1xf32>
    %19 = arith.mulf %16, %16 : vector<2x1xf32>
    %20 = arith.subf %18, %19 : vector<2x1xf32>
    %21 = vector.broadcast %16 : vector<2x1xf32> to vector<2x32xf32>
    %22 = arith.subf %9, %21 : vector<2x32xf32>
    %cst_9 = arith.constant 9.99999974E-6 : f32
    %23 = vector.broadcast %cst_9 : f32 to vector<2x1xf32>
    %24 = arith.addf %20, %23 : vector<2x1xf32>
    %25 = math.rsqrt %24 : vector<2x1xf32>
    %26 = vector.broadcast %25 : vector<2x1xf32> to vector<2x32xf32>
    %27 = arith.mulf %22, %26 : vector<2x32xf32>
    %28 = vector.broadcast %2 : vector<1x32xf32> to vector<2x32xf32>
    %29 = arith.mulf %27, %28 : vector<2x32xf32>
    %30 = vector.broadcast %3 : vector<1x32xf32> to vector<2x32xf32>
    %31 = arith.addf %29, %30 : vector<2x32xf32>
    %cst_10 = arith.constant 0.000000e+00 : f32
    %32 = vector.broadcast %cst_10 : f32 to vector<2x32xf32>
    %33 = arith.maximumf %31, %32 : vector<2x32xf32>
    %c0_11 = arith.constant 0 : index
    %c0_12 = arith.constant 0 : index
    %34 = vector.load %arg3[%c0_11, %c0_12] : memref<32x8xf32, #tpu.memory_space<vmem>>, vector<32x8xf32>
    %cst_13 = arith.constant dense<0.000000e+00> : vector<2x8xf32>
    %35 = tpu.matmul %33, %34, %cst_13 {dimension_numbers = #tpu.dot_dimension_numbers<[1], [0], [0], [1], [0, 0, 1, 1], [], []>} : vector<2x32xf32>, vector<32x8xf32>, vector<2x8xf32> -> vector<2x8xf32>
    %36 = vector.broadcast %4 : vector<1x8xf32> to vector<2x8xf32>
    %37 = arith.addf %35, %36 : vector<2x8xf32>
    %c0_14 = arith.constant 0 : index
    %c0_15 = arith.constant 0 : index
    %38 = vector.load %arg4[%c0_14, %c0_15] : memref<2x8xf32, #tpu.memory_space<vmem>>, vector<2x8xf32>
    tpu.vector_store %arg4[%c0_14, %c0_15], %37 {strides = array<i32>} : memref<2x8xf32, #tpu.memory_space<vmem>>, vector<2x8xf32>,
    return
  }
}

</mosaic_0001>

<llo_original>
// kernel: tpu_custom_call.1
$region0: #{tpu_custom_call.1}
  #allocation0 [shape = 'u32[]', space=smem, size = 0x4, offset = 0x4, fixed_abs, tag = 'smem constant byte address 0x4 - core index']
  #allocation1 [shape = 'u32[72,128]{1,0:T(1,128)}', space=vmem, size = 0x9000, scoped, tag = 'internal scratch']
  %s0 = inlined_call_operand.vmem [shape: f32[2,20], index: 0, kind: input, shape index: {}]
  %s1 = inlined_call_operand.vmem [shape: f32[20,32], index: 1, kind: input, shape index: {}]
  %s2 = inlined_call_operand.vmem [shape: f32[4,32], index: 2, kind: input, shape index: {}]
  %s3 = inlined_call_operand.vmem [shape: f32[32,8], index: 3, kind: input, shape index: {}]
  %s4 = inlined_call_operand.hbm [shape: f32[2,8], index: 4, kind: output, shape index: {}]
  %s5 = sld [smem:[#allocation0]]
  $region26: #{tpu_custom_call.1} parent=0
    _
  %s7 = ssub.s32 1, %s5
  %s8 = scalar_select 0, %s7, %s5
  $region1: #{tpu_custom_call.1} parent=0
    #allocation2 [shape = 'u8[1024]{0}', space=vmem, size = 0x400, scoped, tag = 'output window, operand 0, single buffered']
    #allocation3 [shape = 's32[1]{0}', space=sflag, size = 0x4, scoped, tag = 'scoped memory for tpu_custom_call.1']
    %9 = vsyncpa [#allocation3], 0
    // Predicated region
    $region2: #{tpu_custom_call.1} parent=1 // pred_check
      _
    $region3: #{tpu_custom_call.1} parent=1 // pred_check_branch
      %11 = sbr.rel (0) target = $region5
    $region4: #{tpu_custom_call.1} parent=1 // pred_region
      _
    $region5: #{tpu_custom_call.1} parent=1 // pred_fallthru
      _
    // Predicated region
    $region6: #{tpu_custom_call.1} parent=1 // pred_check
      _
    $region7: #{tpu_custom_call.1} parent=1 // pred_check_branch
      %13 = sbr.rel (0) target = $region9
    $region8: #{tpu_custom_call.1} parent=1 // pred_region
      _
    $region9: #{tpu_custom_call.1} parent=1 // pred_fallthru
      _
    // Predicated region
    $region10: #{tpu_custom_call.1} parent=1 // pred_check
      _
    $region11: #{tpu_custom_call.1} parent=1 // pred_check_branch
      %15 = sbr.rel (0) target = $region13
    $region12: #{tpu_custom_call.1} parent=1 // pred_region
      _
    $region13: #{tpu_custom_call.1} parent=1 // pred_fallthru
      _
    // Predicated region
    $region14: #{tpu_custom_call.1} parent=1 // pred_check
      _
    $region15: #{tpu_custom_call.1} parent=1 // pred_check_branch
      %17 = sbr.rel (0) target = $region17
    $region16: #{tpu_custom_call.1} parent=1 // pred_region
      _
    $region17: #{tpu_custom_call.1} parent=1 // pred_fallthru
      _
    %v18 = vld [vmem:[%s2] sm:$0xf]
    %v19 = vld [vmem:[%s0] sm:$0x3]
    %v20 = vld [vmem:[%s1] sm:$0xff]
    %v21 = vld [vmem:[%s1 + $0x8] sm:$0xff]
    %v22 = vld [vmem:[%s1 + $0x10] sm:$0xf]
    %v23 = vperm.slane %v18, 0
    %vm24 = vcmask 162816
    %v26 = vsel %vm24, %v19, 0
    %vm28 = vcmask 1043456
    %v30 = vsel %vm28, %v22, 0
    %32 = vmatpush.msra.mxu0 0.0
    %33 = vmatpush.msra.mxu0 0.0
    %34 = vmatpush.msra.mxu0 0.0
    %35 = vmatpush.msra.mxu0 0.0
    %36 = vmatpush.msra.mxu0 0.0
    %37 = vmatpush.msra.mxu0 0.0
    %38 = vmatpush.msra.mxu0 0.0
    %39 = vmatpush.msra.mxu0 0.0
    %40 = vmatpush.msra.mxu0 0.0
    %41 = vmatpush.msra.mxu0 0.0
    %42 = vmatpush.msra.mxu0 0.0
    %43 = vmatpush.msra.mxu0 0.0
    %44 = vmatpush.msra.mxu0 0.0
    %45 = vmatpush.msra.mxu0 %v30
    %46 = vmatpush.msra.mxu0 %v21
    %47 = vmatpush.msra.mxu0 %v20
    %48 = vmatmul.f32.gmra.mxu0 %v26
    %v49 = vpop.f32.mrf.mxu0
    %v50 = vadd.f32 %v23, %v49
    %51 = vdwg.mxu0
    %vm52 = vcmask 254976
    %v53 = vsel %vm52, %v50, 0.0
    %54 = vadd.xlane.f32.xlu0 %v53
    %v55 = vpop.xlane.xlu0 %54
    %v56 = vmul.f32 %v50, %v50
    %v57 = vsel %vm52, %v56, 0.0
    %58 = vadd.xlane.f32.xlu0 %v57
    %v59 = vpop.xlane.xlu0 %58
    %v60 = vmul.f32 %v55, 0.03125
    %v61 = vmul.f32 %v59, 0.03125
    %v62 = vmul.f32 %v60, %v60
    %v63 = vsub.f32 %v61, %v62
    %v64 = vsub.f32 %v50, %v60
    %v65 = vadd.f32 %v63, 1e-05
    %v66 = vrsqrt.pop %v65
    %v67 = vmul.f32 %v66, %v65
    %v68 = vmul.f32 %v67, %v66
    %v69 = vmul.f32 0.5, %v68
    %v70 = vsub.f32 1.5, %v69
    %v71 = vmul.f32 %v66, %v70
    %vm72 = vweird.f32 %v65
    %vm73 = vweird.f32 %v66
    %vm74 = vmor %vm72, %vm73
    %v75 = vsel %vm74, %v66, %v71
    %v76 = vmul.f32 %v64, %v75
    %v77 = vperm.slane %v18, 1
    %v78 = vmul.f32 %v76, %v77
    %v79 = vperm.slane %v18, 2
    %v80 = vadd.f32 %v78, %v79
    %v81 = vmax.f32 %v80, 0.0
    %v82 = vld [vmem:[%s3] sm:$0xff]
    %v83 = vld [vmem:[%s3 + $0x8] sm:$0xff]
    %v84 = vld [vmem:[%s3 + $0x10] sm:$0xff]
    %v85 = vld [vmem:[%s3 + $0x18] sm:$0xff]
    %v86 = vperm.slane %v18, 3
    %vm87 = vcmask 261120
    %v89 = vsel %vm87, %v81, 0
    %91 = vmatpush.msra.mxu0 0.0
    %92 = vmatpush.msra.mxu0 0.0
    %93 = vmatpush.msra.mxu0 0.0
    %94 = vmatpush.msra.mxu0 0.0
    %95 = vmatpush.msra.mxu0 0.0
    %96 = vmatpush.msra.mxu0 0.0
    %97 = vmatpush.msra.mxu0 0.0
    %98 = vmatpush.msra.mxu0 0.0
    %99 = vmatpush.msra.mxu0 0.0
    %100 = vmatpush.msra.mxu0 0.0
    %101 = vmatpush.msra.mxu0 0.0
    %102 = vmatpush.msra.mxu0 0.0
    %103 = vmatpush.msra.mxu0 %v85
    %104 = vmatpush.msra.mxu0 %v84
    %105 = vmatpush.msra.mxu0 %v83
    %106 = vmatpush.msra.mxu0 %v82
    %107 = vmatmul.f32.gmra.mxu0 %v89
    %v108 = vpop.f32.mrf.mxu0
    %v109 = vadd.f32 %v86, %v108
    %110 = vdwg.mxu0
    %vm111 = vcmask 58368
    %112 = vst.msk [vmem:[#allocation2] sm:$0x3] %vm111, %v109
    // Predicated region
    $region18: #{tpu_custom_call.1} parent=1 // pred_check
      _
    $region19: #{tpu_custom_call.1} parent=1 // pred_check_branch
      %114 = sbr.rel (0) target = $region21
    $region20: #{tpu_custom_call.1} parent=1 // pred_region
      %116 = vsyncadd [#allocation3], 0
      %s118 = sshll.u32 [#allocation2], 4
      %s119 = int_to_ptr.vmem [resolvable:$true] %s118
      %s120 = sshll.u32 %s4, 4
      %s121 = int_to_ptr.hbm [resolvable:$true] %s120
      %123 = dma.vmem_to_hbm [thread:$0]  %s119, 32, %s121, [#allocation3]
    $region21: #{tpu_custom_call.1} parent=1 // pred_fallthru
      _
    // Predicated region
    $region22: #{tpu_custom_call.1} parent=1 // pred_check
      _
    $region23: #{tpu_custom_call.1} parent=1 // pred_check_branch
      %125 = sbr.rel (0) target = $region25
    $region24: #{tpu_custom_call.1} parent=1 // pred_region
      %127 = dma.done [#allocation3], 32
    $region25: #{tpu_custom_call.1} parent=1 // pred_fallthru
      _
    %128 = vsyncpa [#allocation3], 1

</llo_original>
